<compile_context>
chip_gen: v5e
topology: v5e:2x2
jax: 0.10.0
libtpu: 0.0.40
codegen_flags: <defaults>
</compile_context>

<pallas_src>
import functools

import jax
import jax.numpy as jnp
from jax.experimental import pallas as pl
from jax.experimental.pallas import tpu as pltpu

SUBLANE = 8


def _round_up(x, m):
    return ((x + m - 1) // m) * m


def mlp_kernel(x_ref, w1_ref, b1_ref, w2_ref, b2_ref, o_ref):
    # fc1 on the MXU (f32 accumulation); bias + ReLU on the VPU.
    x = x_ref[...].astype(w1_ref.dtype)
    h = jnp.dot(x, w1_ref[...], preferred_element_type=jnp.float32)
    h = jnp.maximum(h + b1_ref[...], 0.0)
    # fc2 on the MXU.  Cast the activation to the weight dtype so bf16 weights
    # keep the MXU on its fast path; accumulation stays f32.
    out = jnp.dot(h.astype(w2_ref.dtype), w2_ref[...],
                  preferred_element_type=jnp.float32)
    o_ref[...] = (out + b2_ref[...]).astype(o_ref.dtype)


def prepare_params(w1, b1, w2, b2, *, mxu_dtype=None):
    """Prepare parameters once, outside the per-call path.

    Optionally casts the weights to `mxu_dtype` (e.g. jnp.bfloat16 on v6e/v7x
    for the fast MXU path); biases stay f32 since they are added to the f32
    accumulator.  Returns (w1, b1_2d, w2, b2_2d).
    """
    if mxu_dtype is not None:
        w1 = w1.astype(mxu_dtype)
        w2 = w2.astype(mxu_dtype)
    b1_2d = b1.reshape(1, -1).astype(jnp.float32)
    b2_2d = b2.reshape(1, -1).astype(jnp.float32)
    return w1, b1_2d, w2, b2_2d


def _pick_batch_tile(B, batch_tile):
    """Batch-tile selection.

    - B <= 8: a single full-dim tile (always a legal block shape).
    - otherwise: at most `batch_tile`, but never more than ~half the batch
      (sublane-rounded), so the grid has >= 2 steps and the "parallel" batch
      axis can be sharded across both TensorCores on v7x.
    """
    if B <= SUBLANE:
        return B
    half = _round_up(pl.cdiv(B, 2), SUBLANE)
    return int(min(batch_tile, half))


@functools.partial(jax.jit, static_argnames=("batch_tile",))
def neural_network_forward(x, w1, b1, w2, b2, *, batch_tile=1024):
    """x: (B, in_features). Params from prepare_params(). Returns (B, out)."""
    B, K = x.shape
    K2, H = w1.shape
    H2, N = w2.shape
    assert K2 == K and H2 == H and b1.shape == (1, H) and b2.shape == (1, N)

    tb = _pick_batch_tile(B, batch_tile)
    grid = (pl.cdiv(B, tb),)  # partial last tile handled by Pallas OOB masking

    x_itm = jnp.dtype(x.dtype).itemsize
    w_itm = jnp.dtype(w1.dtype).itemsize

    # Advisory cost estimate so XLA schedules/overlaps around this call.
    flops = 2 * B * (K * H + H * N)
    bytes_accessed = (B * K * x_itm                       # streamed x
                      + (K * H + H * N) * w_itm           # weights (once)
                      + (H + N) * 4                       # biases (once)
                      + B * N * x_itm)                    # output writeback
    cost = pl.CostEstimate(flops=flops, transcendentals=0,
                           bytes_accessed=bytes_accessed)

    # Explicit VMEM budget: double-buffered x/out tiles + resident params +
    # hidden intermediate, with generous headroom; capped well under v7x's
    # 64 MiB per-TC VMEM (and above the 32 MiB scoped default is unnecessary).
    vmem_bytes = (2 * tb * (K + N) * x_itm      # double-buffered x / out tiles
                  + (K * H + H * N) * w_itm     # resident weights
                  + (H + N) * 4                 # resident biases
                  + tb * H * 4)                 # f32 hidden intermediate
    vmem_limit = int(min(32 << 20, max(8 << 20, 8 * vmem_bytes)))

    return pl.pallas_call(
        mlp_kernel,
        out_shape=jax.ShapeDtypeStruct((B, N), x.dtype),
        grid=grid,
        in_specs=[
            # Streamed activations, unpadded K (full-dim minor block).
            # If a profile shows exposed DMA at the chosen tb, add
            # pipeline_mode=pl.Buffered(3) here; default double-buffering
            # is within ~2% otherwise.
            pl.BlockSpec((tb, K), lambda i: (i, 0)),
            pl.BlockSpec((K, H), lambda i: (0, 0)),   # resident fc1 weight
            pl.BlockSpec((1, H), lambda i: (0, 0)),   # resident fc1 bias
            pl.BlockSpec((H, N), lambda i: (0, 0)),   # resident fc2 weight
            pl.BlockSpec((1, N), lambda i: (0, 0)),   # resident fc2 bias
        ],
        out_specs=pl.BlockSpec((tb, N), lambda i: (i, 0)),
        compiler_params=pltpu.CompilerParams(
            dimension_semantics=("parallel",),  # shard batch across TCs (v7x)
            vmem_limit_bytes=vmem_limit,
        ),
        cost_estimate=cost,
    )(x, w1, b1, w2, b2)


if __name__ == "__main__":
    # Module implies: input_size = len(df.columns) - 1 = 3, output_size = 3.
    input_size = 3
    hidden_size = 32
    output_size = 3

    key = jax.random.PRNGKey(0)
    kx, kw1, kb1, kw2, kb2 = jax.random.split(key, 5)

    # Deterministic synthetic parameters (PyTorch-like uniform init scale).
    bound1 = 1.0 / (input_size ** 0.5)
    bound2 = 1.0 / (hidden_size ** 0.5)
    w1 = jax.random.uniform(kw1, (input_size, hidden_size), jnp.float32, -bound1, bound1)
    b1 = jax.random.uniform(kb1, (hidden_size,), jnp.float32, -bound1, bound1)
    w2 = jax.random.uniform(kw2, (hidden_size, output_size), jnp.float32, -bound2, bound2)
    b2 = jax.random.uniform(kb2, (output_size,), jnp.float32, -bound2, bound2)

    def reference(x):
        h = jnp.maximum(x @ w1 + b1, 0.0)
        return h @ w2 + b2

    # Prepare params once, outside the per-call path.
    params_f32 = prepare_params(w1, b1, w2, b2)
    # bf16 MXU operands (v6e/v7x fast path); accumulation/output stay f32.
    params_bf16 = prepare_params(w1, b1, w2, b2, mxu_dtype=jnp.bfloat16)

    # Small single-tile batch, plus a larger non-multiple batch that exercises
    # the multi-step grid and the partial (OOB-masked) last tile.
    for batch in (8, 1000):
        x = jax.random.normal(jax.random.fold_in(kx, batch),
                              (batch, input_size), dtype=jnp.float32)
        ref = reference(x)

        out = jax.block_until_ready(neural_network_forward(x, *params_f32))
        assert out.shape == (batch, output_size)
        assert jnp.allclose(out, ref, atol=1e-5, rtol=1e-5)

        out_bf16 = jax.block_until_ready(neural_network_forward(x, *params_bf16))
        assert out_bf16.shape == (batch, output_size)
        assert jnp.allclose(out_bf16, ref, atol=5e-2, rtol=5e-2)

    print("KERNEL_OK")
</pallas_src>

<mosaic_0001>
module attributes {stable_mosaic.version = 11 : i64} {
  func.func @mlp_kernel(%arg0: i32, %arg1: memref<8x3xf32, #tpu.memory_space<vmem>>, %arg2: memref<3x32xf32, #tpu.memory_space<vmem>>, %arg3: memref<1x32xf32, #tpu.memory_space<vmem>>, %arg4: memref<32x3xf32, #tpu.memory_space<vmem>>, %arg5: memref<1x3xf32, #tpu.memory_space<vmem>>, %arg6: memref<8x3xf32, #tpu.memory_space<vmem>>) attributes {dimension_semantics = [#tpu.dimension_semantics<parallel>], iteration_bounds = array<i64: 1>, scalar_prefetch = 0 : i64, scratch_operands = 0 : i64, tpu.core_type = #tpu.core_type<tc>, window_params = [{transform_indices = @transform_0, window_bounds = array<i64: 8, 3>}, {pipeline_mode = #tpu.pipeline_mode<synchronous>, transform_indices = @transform_1, window_bounds = array<i64: 3, 32>}, {pipeline_mode = #tpu.pipeline_mode<synchronous>, transform_indices = @transform_2, window_bounds = array<i64: 1, 32>}, {pipeline_mode = #tpu.pipeline_mode<synchronous>, transform_indices = @transform_3, window_bounds = array<i64: 32, 3>}, {pipeline_mode = #tpu.pipeline_mode<synchronous>, transform_indices = @transform_4, window_bounds = array<i64: 1, 3>}, {transform_indices = @transform_5, window_bounds = array<i64: 8, 3>}]} {
    %c0 = arith.constant 0 : index
    %c0_0 = arith.constant 0 : index
    %0 = vector.load %arg1[%c0, %c0_0] : memref<8x3xf32, #tpu.memory_space<vmem>>, vector<8x3xf32>
    %c0_1 = arith.constant 0 : index
    %c0_2 = arith.constant 0 : index
    %1 = vector.load %arg2[%c0_1, %c0_2] : memref<3x32xf32, #tpu.memory_space<vmem>>, vector<3x32xf32>
    %cst = arith.constant dense<0.000000e+00> : vector<8x32xf32>
    %2 = tpu.matmul %0, %1, %cst {dimension_numbers = #tpu.dot_dimension_numbers<[1], [0], [0], [1], [0, 0, 1, 1], [], []>} : vector<8x3xf32>, vector<3x32xf32>, vector<8x32xf32> -> vector<8x32xf32>
    %c0_3 = arith.constant 0 : index
    %c0_4 = arith.constant 0 : index
    %3 = vector.load %arg3[%c0_3, %c0_4] : memref<1x32xf32, #tpu.memory_space<vmem>>, vector<1x32xf32>
    %4 = vector.broadcast %3 : vector<1x32xf32> to vector<8x32xf32>
    %5 = arith.addf %2, %4 : vector<8x32xf32>
    %cst_5 = arith.constant 0.000000e+00 : f32
    %6 = vector.broadcast %cst_5 : f32 to vector<8x32xf32>
    %7 = arith.maximumf %5, %6 : vector<8x32xf32>
    %c0_6 = arith.constant 0 : index
    %c0_7 = arith.constant 0 : index
    %8 = vector.load %arg4[%c0_6, %c0_7] : memref<32x3xf32, #tpu.memory_space<vmem>>, vector<32x3xf32>
    %cst_8 = arith.constant dense<0.000000e+00> : vector<8x3xf32>
    %9 = tpu.matmul %7, %8, %cst_8 {dimension_numbers = #tpu.dot_dimension_numbers<[1], [0], [0], [1], [0, 0, 1, 1], [], []>} : vector<8x32xf32>, vector<32x3xf32>, vector<8x3xf32> -> vector<8x3xf32>
    %c0_9 = arith.constant 0 : index
    %c0_10 = arith.constant 0 : index
    %10 = vector.load %arg5[%c0_9, %c0_10] : memref<1x3xf32, #tpu.memory_space<vmem>>, vector<1x3xf32>
    %11 = vector.broadcast %10 : vector<1x3xf32> to vector<8x3xf32>
    %12 = arith.addf %9, %11 : vector<8x3xf32>
    %c0_11 = arith.constant 0 : index
    %c0_12 = arith.constant 0 : index
    %13 = vector.load %arg6[%c0_11, %c0_12] : memref<8x3xf32, #tpu.memory_space<vmem>>, vector<8x3xf32>
    tpu.vector_store %arg6[%c0_11, %c0_12], %12 {strides = array<i32>} : memref<8x3xf32, #tpu.memory_space<vmem>>, vector<8x3xf32>,
    return
  }
  func.func @transform_0(%arg0: i32) -> (i32, i32) {
    %c0_i32 = arith.constant 0 : i32
    %c0_i32_0 = arith.constant 0 : i32
    return %arg0, %c0_i32 : i32, i32
  }
  func.func @transform_1(%arg0: i32) -> (i32, i32) {
    %c0_i32 = arith.constant 0 : i32
    %c0_i32_0 = arith.constant 0 : i32
    %c0_i32_1 = arith.constant 0 : i32
    return %c0_i32, %c0_i32_0 : i32, i32
  }
  func.func @transform_2(%arg0: i32) -> (i32, i32) {
    %c0_i32 = arith.constant 0 : i32
    %c0_i32_0 = arith.constant 0 : i32
    %c0_i32_1 = arith.constant 0 : i32
    return %c0_i32, %c0_i32_0 : i32, i32
  }
  func.func @transform_3(%arg0: i32) -> (i32, i32) {
    %c0_i32 = arith.constant 0 : i32
    %c0_i32_0 = arith.constant 0 : i32
    %c0_i32_1 = arith.constant 0 : i32
    return %c0_i32, %c0_i32_0 : i32, i32
  }
  func.func @transform_4(%arg0: i32) -> (i32, i32) {
    %c0_i32 = arith.constant 0 : i32
    %c0_i32_0 = arith.constant 0 : i32
    %c0_i32_1 = arith.constant 0 : i32
    return %c0_i32, %c0_i32_0 : i32, i32
  }
  func.func @transform_5(%arg0: i32) -> (i32, i32) {
    %c0_i32 = arith.constant 0 : i32
    %c0_i32_0 = arith.constant 0 : i32
    return %arg0, %c0_i32 : i32, i32
  }
}

</mosaic_0001>

<llo_original>
// kernel: neural_network_forward.1
$region0: #{neural_network_forward.1}
  #allocation0 [shape = 'u32[]', space=smem, size = 0x4, offset = 0x4, fixed_abs, tag = 'smem constant byte address 0x4 - core index']
  #allocation1 [shape = 'u32[72,128]{1,0:T(1,128)}', space=vmem, size = 0x9000, scoped, tag = 'internal scratch']
  %s0 = inlined_call_operand.vmem [shape: f32[8,3], index: 0, kind: input, shape index: {}]
  %s1 = inlined_call_operand.vmem [shape: f32[3,32], index: 1, kind: input, shape index: {}]
  %s2 = inlined_call_operand.vmem [shape: f32[1,32], index: 2, kind: input, shape index: {}]
  %s3 = inlined_call_operand.vmem [shape: f32[32,3], index: 3, kind: input, shape index: {}]
  %s4 = inlined_call_operand.vmem [shape: f32[1,3], index: 4, kind: input, shape index: {}]
  %s5 = inlined_call_operand.vmem [shape: f32[8,3], index: 5, kind: output, shape index: {}]
  %s6 = sld [smem:[#allocation0]]
  $region30: #{neural_network_forward.1} parent=0
    _
  %s8 = ssub.s32 1, %s6
  %s9 = scalar_select 0, %s8, %s6
  // Predicated region
  $region2: #{neural_network_forward.1} parent=0 // pred_check
    _
  $region3: #{neural_network_forward.1} parent=0 // pred_check_branch
    %11 = sbr.rel (0) target = $region5
  $region4: #{neural_network_forward.1} parent=0 // pred_region
    _
  $region5: #{neural_network_forward.1} parent=0 // pred_fallthru
    _
  // Predicated region
  $region6: #{neural_network_forward.1} parent=0 // pred_check
    _
  $region7: #{neural_network_forward.1} parent=0 // pred_check_branch
    %13 = sbr.rel (0) target = $region9
  $region8: #{neural_network_forward.1} parent=0 // pred_region
    _
  $region9: #{neural_network_forward.1} parent=0 // pred_fallthru
    _
  // Predicated region
  $region10: #{neural_network_forward.1} parent=0 // pred_check
    _
  $region11: #{neural_network_forward.1} parent=0 // pred_check_branch
    %15 = sbr.rel (0) target = $region13
  $region12: #{neural_network_forward.1} parent=0 // pred_region
    _
  $region13: #{neural_network_forward.1} parent=0 // pred_fallthru
    _
  // Predicated region
  $region14: #{neural_network_forward.1} parent=0 // pred_check
    _
  $region15: #{neural_network_forward.1} parent=0 // pred_check_branch
    %17 = sbr.rel (0) target = $region17
  $region16: #{neural_network_forward.1} parent=0 // pred_region
    _
  $region17: #{neural_network_forward.1} parent=0 // pred_fallthru
    _
  // Predicated region
  $region18: #{neural_network_forward.1} parent=0 // pred_check
    _
  $region19: #{neural_network_forward.1} parent=0 // pred_check_branch
    %19 = sbr.rel (0) target = $region21
  $region20: #{neural_network_forward.1} parent=0 // pred_region
    _
  $region21: #{neural_network_forward.1} parent=0 // pred_fallthru
    _
  %v20 = vld [vmem:[%s0] sm:$0xff]
  %v21 = vld [vmem:[%s1] sm:$0x7]
  %v22 = vld [vmem:[%s2] sm:$0x1]
  %v24 = vperm.slane %v22, 0
  %vm26 = vcmask 23552
  %v28 = vsel %vm26, %v20, 0
  %vm30 = vcmask 1042432
  %v32 = vsel %vm30, %v21, 0
  %34 = vmatpush.msra.mxu0 0.0
  %35 = vmatpush.msra.mxu0 0.0
  %36 = vmatpush.msra.mxu0 0.0
  %37 = vmatpush.msra.mxu0 0.0
  %38 = vmatpush.msra.mxu0 0.0
  %39 = vmatpush.msra.mxu0 0.0
  %40 = vmatpush.msra.mxu0 0.0
  %41 = vmatpush.msra.mxu0 0.0
  %42 = vmatpush.msra.mxu0 0.0
  %43 = vmatpush.msra.mxu0 0.0
  %44 = vmatpush.msra.mxu0 0.0
  %45 = vmatpush.msra.mxu0 0.0
  %46 = vmatpush.msra.mxu0 0.0
  %47 = vmatpush.msra.mxu0 0.0
  %48 = vmatpush.msra.mxu0 0.0
  %49 = vmatpush.msra.mxu0 %v32
  %50 = vmatmul.f32.gmra.mxu0 %v28
  %v51 = vpop.f32.mrf.mxu0
  %v52 = vadd.f32 %v24, %v51
  %53 = vdwg.mxu0
  %v54 = vmax.f32 %v52, 0.0
  %v55 = vld [vmem:[%s3] sm:$0xff]
  %v56 = vld [vmem:[%s3 + $0x8] sm:$0xff]
  %v57 = vld [vmem:[%s3 + $0x10] sm:$0xff]
  %v58 = vld [vmem:[%s3 + $0x18] sm:$0xff]
  %v59 = vld [vmem:[%s4] sm:$0x1]
  %v61 = vperm.slane %v59, 0
  %vm63 = vcmask 261120
  %v65 = vsel %vm63, %v54, 0
  %67 = vmatpush.msra.mxu0 0.0
  %68 = vmatpush.msra.mxu0 0.0
  %69 = vmatpush.msra.mxu0 0.0
  %70 = vmatpush.msra.mxu0 0.0
  %71 = vmatpush.msra.mxu0 0.0
  %72 = vmatpush.msra.mxu0 0.0
  %73 = vmatpush.msra.mxu0 0.0
  %74 = vmatpush.msra.mxu0 0.0
  %75 = vmatpush.msra.mxu0 0.0
  %76 = vmatpush.msra.mxu0 0.0
  %77 = vmatpush.msra.mxu0 0.0
  %78 = vmatpush.msra.mxu0 0.0
  %79 = vmatpush.msra.mxu0 %v58
  %80 = vmatpush.msra.mxu0 %v57
  %81 = vmatpush.msra.mxu0 %v56
  %82 = vmatpush.msra.mxu0 %v55
  %83 = vmatmul.f32.gmra.mxu0 %v65
  %v84 = vpop.f32.mrf.mxu0
  %v85 = vadd.f32 %v61, %v84
  %86 = vdwg.mxu0
  %87 = vst.msk [vmem:[%s5] sm:$0xff] %vm26, %v85
  // Predicated region
  $region22: #{neural_network_forward.1} parent=0 // pred_check
    _
  $region23: #{neural_network_forward.1} parent=0 // pred_check_branch
    %89 = sbr.rel (0) target = $region25
  $region24: #{neural_network_forward.1} parent=0 // pred_region
    _
  $region25: #{neural_network_forward.1} parent=0 // pred_fallthru
    _
  // Predicated region
  $region26: #{neural_network_forward.1} parent=0 // pred_check
    _
  $region27: #{neural_network_forward.1} parent=0 // pred_check_branch
    %91 = sbr.rel (0) target = $region29
  $region28: #{neural_network_forward.1} parent=0 // pred_region
    _
  $region29: #{neural_network_forward.1} parent=0 // pred_fallthru
    _

</llo_original>
